<compile_context>
chip_gen: v7x
topology: tpu7x:2x2x1
jax: 0.10.0
libtpu: 0.0.40
codegen_flags: <defaults>
</compile_context>

<pallas_src>
import functools
import math

import jax
import jax.numpy as jnp
import numpy as np
from jax import lax
from jax.experimental import pallas as pl
from jax.experimental.pallas import tpu as pltpu

NEG_INF = -0.7 * float(np.finfo(np.float32).max)  # finite "minus infinity"


# ----------------------------------------------------------------------------
# Hardware-generation helpers
# ----------------------------------------------------------------------------
def _device_kind():
    try:
        return jax.devices()[0].device_kind.lower()
    except Exception:
        return ""


def _vmem_limit_bytes():
    kind = _device_kind()
    if "v5" in kind or "v6" in kind:
        return 96 * 1024 * 1024       # 128 MiB physical VMEM
    return 48 * 1024 * 1024           # v7x has 64 MiB; leave pipeline headroom


def _attn_tile_targets():
    kind = _device_kind()
    if "v5" in kind:
        return 512, 128               # 4x128^2 MXU
    if "v6" in kind:
        return 512, 256               # 2x256^2 MXU
    return 256, 256                   # v7x (64 MiB VMEM) / unknown


def _tile(dim, target, multiple=8):
    """Largest divisor of `dim` that is <= target (prefer multiples of `multiple`)."""
    # TODO(synk): pad awkward dims instead of shrinking (keeps lane-dense stores).
    if dim <= target:
        return dim
    best = None
    for t in range(target, 0, -1):
        if dim % t == 0:
            if t % multiple == 0:
                return t
            if best is None:
                best = t
    return best or dim


# ----------------------------------------------------------------------------
# Tiled linear projection: y = x @ w_t, weight pre-transposed to (K, N)
# ----------------------------------------------------------------------------
def _linear_kernel(x_ref, w_ref, o_ref, acc_ref):
    @pl.when(pl.program_id(2) == 0)
    def _init():
        acc_ref[...] = jnp.zeros(acc_ref.shape, jnp.float32)

    acc_ref[...] += jnp.dot(x_ref[...], w_ref[...],
                            preferred_element_type=jnp.float32)

    @pl.when(pl.program_id(2) == pl.num_programs(2) - 1)
    def _finalize():
        o_ref[...] = acc_ref[...].astype(o_ref.dtype)


def linear(x2d, w_t, *, tm=512, tn=512, tk=512):
    M, K = x2d.shape
    K2, N = w_t.shape
    assert K == K2
    tm = _tile(M, tm, 8)
    tn = _tile(N, tn, 128)
    tk = _tile(K, tk, 128)
    grid = (M // tm, N // tn, K // tk)

    return pl.pallas_call(
        _linear_kernel,
        out_shape=jax.ShapeDtypeStruct((M, N), x2d.dtype),
        grid_spec=pltpu.PrefetchScalarGridSpec(
            num_scalar_prefetch=0,
            grid=grid,
            in_specs=[
                pl.BlockSpec((tm, tk), lambda i, j, k: (i, k)),
                pl.BlockSpec((tk, tn), lambda i, j, k: (k, j)),
            ],
            out_specs=pl.BlockSpec((tm, tn), lambda i, j, k: (i, j)),
            scratch_shapes=[pltpu.VMEM((tm, tn), jnp.float32)],
        ),
        compiler_params=pltpu.CompilerParams(
            dimension_semantics=("parallel", "parallel", "arbitrary"),
            vmem_limit_bytes=_vmem_limit_bytes(),
        ),
    )(x2d, w_t)


# ----------------------------------------------------------------------------
# Flash-style causal attention with fused RoPE and GQA
# Grid: (B, kv_group_blocks, triangular (qi, ki) schedule)
# ----------------------------------------------------------------------------
def _flash_kernel(qi_ref, ki_ref, last_ref,                 # scalar prefetch (SMEM)
                  q_ref, k_ref, v_ref, csq_ref, csk_ref,    # inputs
                  o_ref,                                     # output
                  qrot_ref, krot_ref, m_ref, l_ref, acc_ref,  # VMEM scratch
                  *, tq, tk, groups, rep, head_dim):
    s_idx = pl.program_id(2)
    qi = qi_ref[s_idx]
    ki = ki_ref[s_idx]
    D = head_dim
    Dh = D // 2
    n_heads_blk = groups * rep

    # --- new q row: reset running stats, RoPE the q tile once (half-split) ---
    @pl.when(ki == 0)
    def _init():
        m_ref[...] = jnp.full(m_ref.shape, NEG_INF, jnp.float32)
        l_ref[...] = jnp.zeros(l_ref.shape, jnp.float32)
        acc_ref[...] = jnp.zeros(acc_ref.shape, jnp.float32)
        cos = csq_ref[:, :Dh]
        sin = csq_ref[:, Dh:]
        qraw = q_ref[0]
        for h in range(n_heads_blk):
            a = qraw[:, h * D:h * D + Dh]
            b = qraw[:, h * D + Dh:(h + 1) * D]
            qrot_ref[:, h * D:h * D + Dh] = (a * cos - b * sin).astype(qrot_ref.dtype)
            qrot_ref[:, h * D + Dh:(h + 1) * D] = (a * sin + b * cos).astype(qrot_ref.dtype)

    # --- RoPE the k tile for this step (cheap VPU work vs. the MXU dots) -----
    cosk = csk_ref[:, :Dh]
    sink = csk_ref[:, Dh:]
    kraw = k_ref[0]
    for g in range(groups):
        a = kraw[:, g * D:g * D + Dh]
        b = kraw[:, g * D + Dh:(g + 1) * D]
        krot_ref[:, g * D:g * D + Dh] = (a * cosk - b * sink).astype(krot_ref.dtype)
        krot_ref[:, g * D + Dh:(g + 1) * D] = (a * sink + b * cosk).astype(krot_ref.dtype)

    # Mask only tiles that straddle the diagonal (global-index condition,
    # works with decoupled tq/tk).
    need_mask = (ki * tk + (tk - 1)) > (qi * tq)

    def update(masked):
        v = v_ref[0]
        if masked:
            row = qi * tq + lax.broadcasted_iota(jnp.int32, (tq, tk), 0)
            col = ki * tk + lax.broadcasted_iota(jnp.int32, (tq, tk), 1)
            causal = row >= col
        for g in range(groups):
            # K/V group slab stays resident; reused across all `rep` heads.
            kg = krot_ref[:, g * D:(g + 1) * D]
            vg = v[:, g * D:(g + 1) * D]
            for r in range(rep):
                h = g * rep + r
                qh = qrot_ref[:, h * D:(h + 1) * D]
                scores = lax.dot_general(
                    qh, kg, (((1,), (1,)), ((), ())),
                    preferred_element_type=jnp.float32)          # (tq, tk)
                if masked:
                    scores = jnp.where(causal, scores, NEG_INF)
                m_prev = m_ref[h]
                m_new = jnp.maximum(m_prev, jnp.max(scores, axis=-1, keepdims=True))
                alpha = jnp.exp(m_prev - m_new)
                p = jnp.exp(scores - m_new)
                l_ref[h] = alpha * l_ref[h] + jnp.sum(p, axis=-1, keepdims=True)
                m_ref[h] = m_new
                pv = jnp.dot(p.astype(vg.dtype), vg,
                             preferred_element_type=jnp.float32)
                acc_ref[:, h * D:(h + 1) * D] = (
                    alpha * acc_ref[:, h * D:(h + 1) * D] + pv)

    @pl.when(need_mask)
    def _diag():
        update(True)

    @pl.when(jnp.logical_not(need_mask))
    def _below():
        update(False)

    @pl.when(last_ref[s_idx] == 1)
    def _finalize():
        for h in range(n_heads_blk):
            inv = 1.0 / l_ref[h]      # exact reciprocal (training-grade numerics)
            acc_ref[:, h * D:(h + 1) * D] = acc_ref[:, h * D:(h + 1) * D] * inv
        # Single lane-dense (tq, width) HBM write.
        o_ref[0] = acc_ref[...].astype(o_ref.dtype)


def flash_causal_attention(q, k, v, rope_cs, n_heads, n_kv_heads, head_dim):
    # q: (B, S, H*D), k/v: (B, S, Hkv*D), rope_cs: (S, D)  ->  (B, S, H*D)
    B, S, Nq = q.shape
    Nkv = k.shape[-1]
    assert n_heads % n_kv_heads == 0
    rep = n_heads // n_kv_heads
    D = head_dim

    tq_t, tk_t = _attn_tile_targets()
    tq = _tile(S, tq_t, 8)
    tk = _tile(S, tk_t, 8)

    # Put KV groups on the grid only when the per-group slab is lane-aligned
    # (head_dim % 128 == 0); otherwise fall back to full-width blocks.
    if D % 128 == 0 or n_kv_heads == 1:
        n_groups_grid = n_kv_heads
        groups_blk = 1
    else:
        n_groups_grid = 1
        groups_blk = n_kv_heads
    q_hd = groups_blk * rep * D
    kv_hd = groups_blk * D

    # Triangular (qi, ki) schedule: no dead above-diagonal grid steps.
    qi_l, ki_l, last_l = [], [], []
    for qi in range(S // tq):
        k_hi = ((qi + 1) * tq - 1) // tk
        for ki in range(k_hi + 1):
            qi_l.append(qi)
            ki_l.append(ki)
            last_l.append(1 if ki == k_hi else 0)
    qi_arr = jnp.asarray(qi_l, jnp.int32)
    ki_arr = jnp.asarray(ki_l, jnp.int32)
    last_arr = jnp.asarray(last_l, jnp.int32)
    n_steps = len(qi_l)

    def q_map(b, g, s, qi_r, ki_r, la_r):
        return (b, qi_r[s], g)

    def kv_map(b, g, s, qi_r, ki_r, la_r):
        return (b, ki_r[s], g)

    def csq_map(b, g, s, qi_r, ki_r, la_r):
        return (qi_r[s], 0)

    def csk_map(b, g, s, qi_r, ki_r, la_r):
        return (ki_r[s], 0)

    kernel = functools.partial(
        _flash_kernel, tq=tq, tk=tk, groups=groups_blk, rep=rep, head_dim=D)

    return pl.pallas_call(
        kernel,
        out_shape=jax.ShapeDtypeStruct((B, S, Nq), q.dtype),
        grid_spec=pltpu.PrefetchScalarGridSpec(
            num_scalar_prefetch=3,
            grid=(B, n_groups_grid, n_steps),
            in_specs=[
                pl.BlockSpec((1, tq, q_hd), q_map),
                pl.BlockSpec((1, tk, kv_hd), kv_map),
                pl.BlockSpec((1, tk, kv_hd), kv_map),
                pl.BlockSpec((tq, D), csq_map),
                pl.BlockSpec((tk, D), csk_map),
            ],
            out_specs=pl.BlockSpec((1, tq, q_hd), q_map),
            scratch_shapes=[
                pltpu.VMEM((tq, q_hd), q.dtype),                     # RoPE'd q tile
                pltpu.VMEM((tk, kv_hd), k.dtype),                    # RoPE'd k tile
                pltpu.VMEM((groups_blk * rep, tq, 1), jnp.float32),  # running max
                pltpu.VMEM((groups_blk * rep, tq, 1), jnp.float32),  # running sum
                pltpu.VMEM((tq, q_hd), jnp.float32),                 # accumulator
            ],
        ),
        compiler_params=pltpu.CompilerParams(
            dimension_semantics=("parallel", "parallel", "arbitrary"),
            vmem_limit_bytes=_vmem_limit_bytes(),
        ),
    )(qi_arr, ki_arr, last_arr, q, k, v, rope_cs, rope_cs)


# ----------------------------------------------------------------------------
# RoPE tables & one-time parameter preparation
# ----------------------------------------------------------------------------
def precompute_freqs_cis(head_dim, seq_len, theta):
    freqs = 1.0 / (theta ** (jnp.arange(0, head_dim, 2, dtype=jnp.float32) / head_dim))
    t = jnp.arange(seq_len, dtype=jnp.float32)
    angles = jnp.outer(t, freqs)                                   # (S, D//2)
    return jnp.stack([jnp.cos(angles), jnp.sin(angles)], axis=-1)  # (S, D//2, 2)


def rope_cos_sin(freq_cis):
    # Packed (S, D): [:, :D//2] = cos, [:, D//2:] = sin  (half-split layout).
    return jnp.concatenate([freq_cis[..., 0], freq_cis[..., 1]], axis=-1).astype(jnp.float32)


def prepare_params(params, n_heads, n_kv_heads, head_dim, dim):
    """One-time prep: de-interleave wq/wk head dims (so in-kernel RoPE uses the
    half-split form), fold 1/sqrt(D) into wq, fuse QKV, pre-transpose to (K,N)."""
    D = head_dim
    scale = 1.0 / math.sqrt(D)
    perm = np.concatenate([np.arange(0, D, 2), np.arange(1, D, 2)])
    wq = params["wq"].reshape(n_heads, D, dim)[:, perm, :].reshape(n_heads * D, dim)
    wk = params["wk"].reshape(n_kv_heads, D, dim)[:, perm, :].reshape(n_kv_heads * D, dim)
    wq = wq * scale
    w_qkv_t = jnp.concatenate([wq, wk, params["wv"]], axis=0).T    # (dim, Nq+2Nkv)
    wo_t = params["wo"].T                                          # (Nq, dim)
    return {"w_qkv_t": w_qkv_t, "wo_t": wo_t}


# ----------------------------------------------------------------------------
# Attention module forward
# ----------------------------------------------------------------------------
def attention_forward(x, freq_cis, prepared, n_heads, n_kv_heads, head_dim):
    B, S, dim = x.shape
    Nq = n_heads * head_dim
    Nkv = n_kv_heads * head_dim
    x2d = x.reshape(B * S, dim)

    # Fused QKV projection: one tiled matmul, one read of x.
    qkv = linear(x2d, prepared["w_qkv_t"])                # (B*S, Nq + 2*Nkv)
    q = qkv[:, :Nq].reshape(B, S, Nq)
    k = qkv[:, Nq:Nq + Nkv].reshape(B, S, Nkv)
    v = qkv[:, Nq + Nkv:].reshape(B, S, Nkv)

    rope_cs = rope_cos_sin(freq_cis)                      # (S, head_dim)

    # RoPE is applied inside the flash kernel (no extra HBM round trip).
    o = flash_causal_attention(q, k, v, rope_cs, n_heads, n_kv_heads, head_dim)
    return linear(o.reshape(B * S, Nq), prepared["wo_t"]).reshape(B, S, dim)


# ----------------------------------------------------------------------------
# Pure-JAX reference (original adjacent-pair RoPE + unpermuted weights)
# ----------------------------------------------------------------------------
def apply_rope_ref(x, freq_cis):
    B, S, H, D = x.shape
    xr = x.reshape(B, S, H, D // 2, 2)
    cos = freq_cis[None, :, None, :, 0]
    sin = freq_cis[None, :, None, :, 1]
    x0, x1 = xr[..., 0], xr[..., 1]
    out = jnp.stack([x0 * cos - x1 * sin, x0 * sin + x1 * cos], axis=-1)
    return out.reshape(B, S, H, D)


def reference_forward(x, freq_cis, params, n_heads, n_kv_heads, head_dim):
    B, S, dim = x.shape
    x2d = x.reshape(B * S, dim)
    q = (x2d @ params["wq"].T).reshape(B, S, n_heads, head_dim)
    k = (x2d @ params["wk"].T).reshape(B, S, n_kv_heads, head_dim)
    v = (x2d @ params["wv"].T).reshape(B, S, n_kv_heads, head_dim)
    q = apply_rope_ref(q, freq_cis).transpose(0, 2, 1, 3)
    k = apply_rope_ref(k, freq_cis).transpose(0, 2, 1, 3)
    v = v.transpose(0, 2, 1, 3)
    rep = n_heads // n_kv_heads
    k = jnp.repeat(k, rep, axis=1)
    v = jnp.repeat(v, rep, axis=1)
    s = jnp.einsum("bhqd,bhkd->bhqk", q, k) / math.sqrt(head_dim)
    mask = jnp.tril(jnp.ones((S, S), dtype=bool))
    s = jnp.where(mask[None, None], s, -jnp.inf)
    p = jax.nn.softmax(s, axis=-1)
    o = jnp.einsum("bhqk,bhkd->bhqd", p, v)
    o = o.transpose(0, 2, 1, 3).reshape(B * S, n_heads * head_dim)
    return (o @ params["wo"].T).reshape(B, S, dim)


# ----------------------------------------------------------------------------
if __name__ == "__main__":
    # AttentionArgs(n_heads=4, n_kv_heads=2), dim=32 -> head_dim = 32 // 4 = 8
    B, S, dim = 2, 8, 32
    n_heads, n_kv_heads = 4, 2
    head_dim = dim // n_heads
    rope_theta = 10000.0

    key = jax.random.PRNGKey(0)
    kx, kq, kk, kv, ko = jax.random.split(key, 5)
    init_std = dim ** -0.5
    params = {
        "wq": init_std * jax.random.normal(kq, (n_heads * head_dim, dim), jnp.float32),
        "wk": init_std * jax.random.normal(kk, (n_kv_heads * head_dim, dim), jnp.float32),
        "wv": init_std * jax.random.normal(kv, (n_kv_heads * head_dim, dim), jnp.float32),
        "wo": init_std * jax.random.normal(ko, (dim, n_heads * head_dim), jnp.float32),
    }

    x = jax.random.normal(kx, (B, S, dim), jnp.float32)
    freq_cis = precompute_freqs_cis(head_dim, S, rope_theta)

    prepared = prepare_params(params, n_heads, n_kv_heads, head_dim, dim)
    out = attention_forward(x, freq_cis, prepared, n_heads, n_kv_heads, head_dim)
    out = jax.block_until_ready(out)

    ref = reference_forward(x, freq_cis, params, n_heads, n_kv_heads, head_dim)
    np.testing.assert_allclose(np.asarray(out), np.asarray(ref), rtol=2e-3, atol=2e-3)

    print("KERNEL_OK")
</pallas_src>

<mosaic_0001>
module attributes {stable_mosaic.version = 11 : i64} {
  func.func @_linear_kernel(%arg0: i32, %arg1: i32, %arg2: i32, %arg3: memref<16x32xf32, #tpu.memory_space<vmem>>, %arg4: memref<32x64xf32, #tpu.memory_space<vmem>>, %arg5: memref<16x64xf32, #tpu.memory_space<vmem>>, %arg6: memref<16x64xf32, #tpu.memory_space<vmem>>) attributes {dimension_semantics = [#tpu.dimension_semantics<parallel>, #tpu.dimension_semantics<parallel>, #tpu.dimension_semantics<arbitrary>], iteration_bounds = array<i64: 1, 1, 1>, scalar_prefetch = 0 : i64, scratch_operands = 1 : i64, tpu.core_type = #tpu.core_type<tc>, window_params = [{transform_indices = @transform_0, window_bounds = array<i64: 16, 32>}, {transform_indices = @transform_1, window_bounds = array<i64: 32, 64>}, {transform_indices = @transform_2, window_bounds = array<i64: 16, 64>}]} {
    %c0_i32 = arith.constant 0 : i32
    %0 = arith.cmpi eq, %arg2, %c0_i32 : i32
    %1 = arith.extui %0 : i1 to i32
    %c0_i32_0 = arith.constant 0 : i32
    %2 = arith.cmpi ne, %1, %c0_i32_0 : i32
    scf.if %2 {
      %cst_10 = arith.constant 0.000000e+00 : f32
      %12 = vector.broadcast %cst_10 : f32 to vector<16x64xf32>
      %c0_11 = arith.constant 0 : index
      %c0_12 = arith.constant 0 : index
      %13 = vector.load %arg6[%c0_11, %c0_12] : memref<16x64xf32, #tpu.memory_space<vmem>>, vector<16x64xf32>
      tpu.vector_store %arg6[%c0_11, %c0_12], %12 {strides = array<i32>} : memref<16x64xf32, #tpu.memory_space<vmem>>, vector<16x64xf32>,
    } else {
    }
    %c0 = arith.constant 0 : index
    %c0_1 = arith.constant 0 : index
    %3 = vector.load %arg6[%c0, %c0_1] : memref<16x64xf32, #tpu.memory_space<vmem>>, vector<16x64xf32>
    %c0_2 = arith.constant 0 : index
    %c0_3 = arith.constant 0 : index
    %4 = vector.load %arg3[%c0_2, %c0_3] : memref<16x32xf32, #tpu.memory_space<vmem>>, vector<16x32xf32>
    %c0_4 = arith.constant 0 : index
    %c0_5 = arith.constant 0 : index
    %5 = vector.load %arg4[%c0_4, %c0_5] : memref<32x64xf32, #tpu.memory_space<vmem>>, vector<32x64xf32>
    %cst = arith.constant dense<0.000000e+00> : vector<16x64xf32>
    %6 = tpu.matmul %4, %5, %cst {dimension_numbers = #tpu.dot_dimension_numbers<[1], [0], [0], [1], [0, 0, 1, 1], [], []>} : vector<16x32xf32>, vector<32x64xf32>, vector<16x64xf32> -> vector<16x64xf32>
    %7 = arith.addf %3, %6 : vector<16x64xf32>
    %c0_6 = arith.constant 0 : index
    %c0_7 = arith.constant 0 : index
    %8 = vector.load %arg6[%c0_6, %c0_7] : memref<16x64xf32, #tpu.memory_space<vmem>>, vector<16x64xf32>
    tpu.vector_store %arg6[%c0_6, %c0_7], %7 {strides = array<i32>} : memref<16x64xf32, #tpu.memory_space<vmem>>, vector<16x64xf32>,
    %c0_i32_8 = arith.constant 0 : i32
    %9 = arith.cmpi eq, %arg2, %c0_i32_8 : i32
    %10 = arith.extui %9 : i1 to i32
    %c0_i32_9 = arith.constant 0 : i32
    %11 = arith.cmpi ne, %10, %c0_i32_9 : i32
    scf.if %11 {
      %c0_10 = arith.constant 0 : index
      %c0_11 = arith.constant 0 : index
      %12 = vector.load %arg6[%c0_10, %c0_11] : memref<16x64xf32, #tpu.memory_space<vmem>>, vector<16x64xf32>
      %c0_12 = arith.constant 0 : index
      %c0_13 = arith.constant 0 : index
      %13 = vector.load %arg5[%c0_12, %c0_13] : memref<16x64xf32, #tpu.memory_space<vmem>>, vector<16x64xf32>
      tpu.vector_store %arg5[%c0_12, %c0_13], %12 {strides = array<i32>} : memref<16x64xf32, #tpu.memory_space<vmem>>, vector<16x64xf32>,
    } else {
    }
    return
  }
  func.func @transform_0(%arg0: i32, %arg1: i32, %arg2: i32) -> (i32, i32) {
    %c0_i32 = arith.constant 0 : i32
    return %arg0, %arg2 : i32, i32
  }
  func.func @transform_1(%arg0: i32, %arg1: i32, %arg2: i32) -> (i32, i32) {
    %c0_i32 = arith.constant 0 : i32
    return %arg2, %arg1 : i32, i32
  }
  func.func @transform_2(%arg0: i32, %arg1: i32, %arg2: i32) -> (i32, i32) {
    %c0_i32 = arith.constant 0 : i32
    return %arg0, %arg1 : i32, i32
  }
}

</mosaic_0001>

<llo_original>
// kernel: tpu_custom_call.1
$region0: #{tpu_custom_call.1}
  #allocation0 [shape = 'u32[]', space=smem, size = 0x4, offset = 0x4, fixed_abs, tag = 'smem constant byte address 0x4 - core index']
  #allocation1 [shape = 'u32[144,128]{1,0:T(1,128)}', space=vmem, size = 0x12000, scoped, tag = 'internal scratch']
  #allocation2 [shape = 'f32[16,64]{1,0:T(8,128)}', space=vmem, size = 0x2000, scoped, tag = 'scratch operand']
  %s0 = inlined_call_operand.hbm [shape: f32[16,32], index: 0, kind: input, shape index: {}]
  %s1 = inlined_call_operand.hbm [shape: f32[32,64], index: 1, kind: input, shape index: {}]
  %s2 = inlined_call_operand.hbm [shape: f32[16,64], index: 2, kind: output, shape index: {}]
  %s3 = sld [smem:[#allocation0]]
  $region34: #{tpu_custom_call.1} parent=0
    _
  %s5 = ssub.s32 1, %s3
  %s6 = scalar_select 0, %s5, %s3
  $region1: #{tpu_custom_call.1} parent=0
    #allocation3 [shape = 'u8[8192]{0}', space=vmem, size = 0x2000, scoped, tag = 'input window, operand 0, single buffered']
    #allocation4 [shape = 's32[1]{0}', space=sflag, size = 0x4, scoped, tag = 'scoped memory for tpu_custom_call.1']
    #allocation5 [shape = 's32[1]{0}', space=sflag, size = 0x4, scoped, tag = 'scoped memory for tpu_custom_call.1']
    #allocation6 [shape = 'u8[16384]{0}', space=vmem, size = 0x4000, scoped, tag = 'input window, operand 1, single buffered']
    #allocation7 [shape = 's32[1]{0}', space=sflag, size = 0x4, scoped, tag = 'scoped memory for tpu_custom_call.1']
    #allocation8 [shape = 'u8[8192]{0}', space=vmem, size = 0x2000, scoped, tag = 'output window, operand 0, single buffered']
    %7 = vsyncpa [#allocation4], 0
    %8 = vsyncpa [#allocation7], 0
    %9 = vsyncpa [#allocation5], 0
    // Predicated region
    $region2: #{tpu_custom_call.1} parent=1 // pred_check
      _
    $region3: #{tpu_custom_call.1} parent=1 // pred_check_branch
      %11 = sbr.rel (0) target = $region5
    $region4: #{tpu_custom_call.1} parent=1 // pred_region
      %s13 = ssub.s32 256, 256
      %14 = vsyncadd [#allocation4], %s13
      %s15 = sshll.u32 [#allocation3], 4
      %s16 = int_to_ptr.vmem [resolvable:$true] %s15
      %21 = dma.hbm_to_vmem [thread:$0]  %s0, 256, %s16, [#allocation4], 128, 128, 8
    $region5: #{tpu_custom_call.1} parent=1 // pred_fallthru
      _
    // Predicated region
    $region6: #{tpu_custom_call.1} parent=1 // pred_check
      _
    $region7: #{tpu_custom_call.1} parent=1 // pred_check_branch
      %23 = sbr.rel (0) target = $region9
    $region8: #{tpu_custom_call.1} parent=1 // pred_region
      %s25 = ssub.s32 512, 512
      %26 = vsyncadd [#allocation7], %s25
      %s27 = sshll.u32 [#allocation6], 4
      %s28 = int_to_ptr.vmem [resolvable:$true] %s27
      %33 = dma.hbm_to_vmem [thread:$0]  %s1, 512, %s28, [#allocation7], 128, 128, 8
    $region9: #{tpu_custom_call.1} parent=1 // pred_fallthru
      _
    // Predicated region
    $region10: #{tpu_custom_call.1} parent=1 // pred_check
      _
    $region11: #{tpu_custom_call.1} parent=1 // pred_check_branch
      %35 = sbr.rel (0) target = $region13
    $region12: #{tpu_custom_call.1} parent=1 // pred_region
      %36 = dma.done [#allocation4], 256
    $region13: #{tpu_custom_call.1} parent=1 // pred_fallthru
      _
    // Predicated region
    $region14: #{tpu_custom_call.1} parent=1 // pred_check
      _
    $region15: #{tpu_custom_call.1} parent=1 // pred_check_branch
      %38 = sbr.rel (0) target = $region17
    $region16: #{tpu_custom_call.1} parent=1 // pred_region
      %39 = dma.done [#allocation7], 512
    $region17: #{tpu_custom_call.1} parent=1 // pred_fallthru
      _
    %p40 = scmp.eq.s32.totalorder 0, 0
    // Predicated region
    $region18: #{tpu_custom_call.1} parent=1 // pred_check
      %p41 = pneg %p40
    $region19: #{tpu_custom_call.1} parent=1 // pred_check_branch
      %43 = sbr.rel (%p41) target = $region21
    $region20: #{tpu_custom_call.1} parent=1 // pred_region
      %vm44 = vcmask 523264
      %45 = vst.msk [vmem:[#allocation2] sm:$0xff] %vm44, 0.0
      %46 = vst.msk [vmem:[#allocation2 + $0x8] sm:$0xff] %vm44, 0.0
    $region21: #{tpu_custom_call.1} parent=1 // pred_fallthru
      _
    %v47 = vld [vmem:[#allocation2] sm:$0xff]
    %v48 = vld [vmem:[#allocation2 + $0x8] sm:$0xff]
    %v49 = vld [vmem:[#allocation3] sm:$0xff]
    %v50 = vld [vmem:[#allocation3 + $0x8] sm:$0xff]
    %v51 = vld [vmem:[#allocation6] sm:$0xff]
    %v52 = vld [vmem:[#allocation6 + $0x8] sm:$0xff]
    %v53 = vld [vmem:[#allocation6 + $0x10] sm:$0xff]
    %v54 = vld [vmem:[#allocation6 + $0x18] sm:$0xff]
    %vm55 = vcmask 261120
    %v57 = vsel %vm55, %v49, 0
    %v60 = vsel %vm55, %v50, 0
    %62 = vmatprep.subr.mxu0 0.0
    %63 = vmatpush1.msra.mxu0 %v51
    %64 = vmatprep.subr.mxu0 0.0
    %65 = vmatpush1.msra.mxu0 %v52
    %66 = vmatprep.subr.mxu0 0.0
    %67 = vmatpush1.msra.mxu0 %v53
    %68 = vmatprep.subr.mxu0 0.0
    %69 = vmatpush1.msra.mxu0 %v54
    %70 = vmatprep.subr.mxu0 0.0
    %71 = vmatpush1.msra.mxu0 0.0
    %72 = vmatprep.subr.mxu0 0.0
    %73 = vmatpush1.msra.mxu0 0.0
    %74 = vmatprep.subr.mxu0 0.0
    %75 = vmatpush1.msra.mxu0 0.0
    %76 = vmatprep.subr.mxu0 0.0
    %77 = vmatpush1.msra.mxu0 0.0
    %78 = vmatprep.subr.mxu0 0.0
    %79 = vmatpush1.msra.mxu0 0.0
    %80 = vmatprep.subr.mxu0 0.0
    %81 = vmatpush1.msra.mxu0 0.0
    %82 = vmatprep.subr.mxu0 0.0
    %83 = vmatpush1.msra.mxu0 0.0
    %84 = vmatprep.subr.mxu0 0.0
    %85 = vmatpush1.msra.mxu0 0.0
    %86 = vmatprep.subr.mxu0 0.0
    %87 = vmatpush1.msra.mxu0 0.0
    %88 = vmatprep.subr.mxu0 0.0
    %89 = vmatpush1.msra.mxu0 0.0
    %90 = vmatprep.subr.mxu0 0.0
    %91 = vmatpush1.msra.mxu0 0.0
    %92 = vmatprep.subr.mxu0 0.0
    %93 = vmatpush1.msra.mxu0 0.0
    %94 = vmatprep.subr.mxu0 0.0
    %95 = vmatpush1.msra.mxu0 0.0
    %96 = vmatprep.subr.mxu0 0.0
    %97 = vmatpush1.msra.mxu0 0.0
    %98 = vmatprep.subr.mxu0 0.0
    %99 = vmatpush1.msra.mxu0 0.0
    %100 = vmatprep.subr.mxu0 0.0
    %101 = vmatpush1.msra.mxu0 0.0
    %102 = vmatprep.subr.mxu0 0.0
    %103 = vmatpush1.msra.mxu0 0.0
    %104 = vmatprep.subr.mxu0 0.0
    %105 = vmatpush1.msra.mxu0 0.0
    %106 = vmatprep.subr.mxu0 0.0
    %107 = vmatpush1.msra.mxu0 0.0
    %108 = vmatprep.subr.mxu0 0.0
    %109 = vmatpush1.msra.mxu0 0.0
    %110 = vmatprep.subr.mxu0 0.0
    %111 = vmatpush1.msra.mxu0 0.0
    %112 = vmatprep.subr.mxu0 0.0
    %113 = vmatpush1.msra.mxu0 0.0
    %114 = vmatprep.subr.mxu0 0.0
    %115 = vmatpush1.msra.mxu0 0.0
    %116 = vmatprep.subr.mxu0 0.0
    %117 = vmatpush1.msra.mxu0 0.0
    %118 = vmatprep.subr.mxu0 0.0
    %119 = vmatpush1.msra.mxu0 0.0
    %120 = vmatprep.subr.mxu0 0.0
    %121 = vmatpush1.msra.mxu0 0.0
    %122 = vmatprep.subr.mxu0 0.0
    %123 = vmatpush1.msra.mxu0 0.0
    %124 = vmatprep.subr.mxu0 0.0
    %125 = vmatpush1.msra.mxu0 0.0
    %126 = vmatprep.mubr.f32.mxu0 0.0
    %127 = vmatmul.mubr.f32.gmra.mrb[0].mxu0 %v57
    %v128 = vpop.f32.mrb[0].mxu0
    %v129 = vadd.f32 0.0, %v128
    %v130 = vpop.f32.mrb[0].mxu0
    %131 = vmatprep.mubr.f32.mxu0 0.0
    %132 = vmatmul.mubr.f32.gmra.mrb[0].mxu0 %v60
    %v133 = vpop.f32.mrb[0].mxu0
    %v134 = vadd.f32 0.0, %v133
    %v135 = vpop.f32.mrb[0].mxu0
    %136 = vdwg.mxu0
    %v137 = vadd.f32 %v47, %v129
    %v138 = vadd.f32 %v48, %v134
    %vm139 = vcmask 523264
    %140 = vst.msk [vmem:[#allocation2] sm:$0xff] %vm139, %v137
    %141 = vst.msk [vmem:[#allocation2 + $0x8] sm:$0xff] %vm139, %v138
    // Predicated region
    $region22: #{tpu_custom_call.1} parent=1 // pred_check
      %p142 = pneg %p40
    $region23: #{tpu_custom_call.1} parent=1 // pred_check_branch
      %144 = sbr.rel (%p142) target = $region25
    $region24: #{tpu_custom_call.1} parent=1 // pred_region
      %v145 = vld [vmem:[#allocation2] sm:$0xff]
      %v146 = vld [vmem:[#allocation2 + $0x8] sm:$0xff]
      %147 = vst.msk [vmem:[#allocation8] sm:$0xff] %vm139, %v145
      %148 = vst.msk [vmem:[#allocation8 + $0x8] sm:$0xff] %vm139, %v146
    $region25: #{tpu_custom_call.1} parent=1 // pred_fallthru
      _
    // Predicated region
    $region26: #{tpu_custom_call.1} parent=1 // pred_check
      _
    $region27: #{tpu_custom_call.1} parent=1 // pred_check_branch
      %150 = sbr.rel (0) target = $region29
    $region28: #{tpu_custom_call.1} parent=1 // pred_region
      %s152 = ssub.s32 256, 256
      %153 = vsyncadd [#allocation5], %s152
      %s154 = sshll.u32 [#allocation8], 4
      %s155 = int_to_ptr.vmem [resolvable:$true] %s154
      %160 = dma.vmem_to_hbm [thread:$0]  %s155, 256, %s2, [#allocation5], 128, 128, 8
    $region29: #{tpu_custom_call.1} parent=1 // pred_fallthru
      _
    // Predicated region
    $region30: #{tpu_custom_call.1} parent=1 // pred_check
      _
    $region31: #{tpu_custom_call.1} parent=1 // pred_check_branch
      %162 = sbr.rel (0) target = $region33
    $region32: #{tpu_custom_call.1} parent=1 // pred_region
      %163 = dma.done [#allocation5], 256
    $region33: #{tpu_custom_call.1} parent=1 // pred_fallthru
      _
    %164 = vsyncpa [#allocation4], 1
    %165 = vsyncpa [#allocation7], 1
    %166 = vsyncpa [#allocation5], 1

</llo_original>
